<compile_context>
chip_gen: v7x
topology: tpu7x:2x2x1
jax: 0.10.0
libtpu: 0.0.40
codegen_flags: <defaults>
</compile_context>

<pallas_src>
import math
from functools import lru_cache

import jax
import jax.numpy as jnp
from jax.experimental import pallas as pl
from jax.experimental.pallas import tpu as pltpu


def _pe_kernel(coef_ref, cos_ref, sin_ref, o_ref):
    """Fill one (TS, C) tile: o = A * cos_tab + B * sin_tab.

    coef_ref: (1, 2, C) f32 per-tile coefficients (A row 0, B row 1).
    cos_ref/sin_ref: (TS, C) f32 tile-resident local-angle tables.
    o_ref: (TS, C) f32 output tile.
    """
    a = coef_ref[0, 0:1, :]          # (1, C)
    b = coef_ref[0, 1:2, :]          # (1, C)
    o_ref[...] = a * cos_ref[...] + b * sin_ref[...]


def _fold_factor(d_model):
    """Positions folded per lane-row so the stored last dim is 128-lane dense."""
    if d_model < 128 and 128 % d_model == 0:
        return 128 // d_model
    return 1


def _pick_rows(total_rows, lane_width, max_rows=None):
    """Rows per tile: multiple of 8 (or full extent), ~4 MiB per buffer so
    2 resident tables + double-buffered output stay ~24 MiB of VMEM."""
    target_bytes = 4 * 1024 * 1024
    rows = max(8, (target_bytes // (lane_width * 4) // 8) * 8)
    if max_rows is not None:
        rows = min(rows, max(8, (max_rows // 8) * 8))
    return total_rows if total_rows <= rows else rows


@lru_cache(maxsize=8)   # register_buffer semantics: built once per shape
def _pe_table(seq_len, d_model, max_block_rows=None):
    if d_model % 2 != 0:
        raise ValueError("d_model must be even (same assumption as the PyTorch module)")

    k = _fold_factor(d_model)
    lanes = k * d_model                       # C (multiple of 128 when folded)
    rows = -(-seq_len // k)                   # R = ceil(seq / k)

    # Per-lane constants in the folded layout: lane c -> feature c % d_model,
    # in-row position offset c // d_model.  freq values are identical to
    # torch's div_term (same f32 products fed to the same exp).
    lane = jnp.arange(lanes)
    feat = lane % d_model
    grp = (lane // d_model).astype(jnp.float32)
    pair = ((feat // 2) * 2).astype(jnp.float32)
    freq = jnp.exp(pair * (-math.log(10000.0) / d_model))     # (C,)
    odd = (feat % 2) == 1                                      # cos columns

    ts = _pick_rows(rows, lanes, max_block_rows)
    n_tiles = pl.cdiv(rows, ts)

    # Tile-resident tables: cos/sin of theta = p_loc * freq for local positions
    # p_loc in [0, ts*k).  Single f32 rounding of the product, exactly like the
    # torch buffer's position * div_term.  One tile's worth of transcendentals,
    # done once in XLA (the Pallas kernel itself has none).
    p_loc = jnp.arange(ts, dtype=jnp.float32)[:, None] * float(k) + grp[None, :]
    theta = p_loc * freq[None, :]
    cos_tab = jnp.cos(theta)                                   # (ts, C)
    sin_tab = jnp.sin(theta)                                   # (ts, C)

    # Per-tile angle-addition coefficients (phi = tile base position * freq).
    # Tile 0 has phi == 0 -> A,B in {0, 1, -0} -> output == tables exactly.
    base = (jnp.arange(n_tiles, dtype=jnp.float32) * float(ts * k))[:, None]
    phi = base * freq[None, :]
    sin_phi, cos_phi = jnp.sin(phi), jnp.cos(phi)
    coef_a = jnp.where(odd[None, :], cos_phi, sin_phi)
    coef_b = jnp.where(odd[None, :], -sin_phi, cos_phi)
    coef = jnp.stack([coef_a, coef_b], axis=1)                 # (n_tiles, 2, C)

    folded = pl.pallas_call(
        _pe_kernel,
        out_shape=jax.ShapeDtypeStruct((rows, lanes), jnp.float32),
        grid=(n_tiles,),
        in_specs=[
            pl.BlockSpec((1, 2, lanes), lambda i: (i, 0, 0)),   # per-tile coeffs
            pl.BlockSpec((ts, lanes), lambda i: (0, 0)),        # resident cos table
            pl.BlockSpec((ts, lanes), lambda i: (0, 0)),        # resident sin table
        ],
        out_specs=pl.BlockSpec((ts, lanes), lambda i: (i, 0)),
        compiler_params=pltpu.CompilerParams(
            # "parallel" lets v7x shard the sequence axis across both TCs; if a
            # trace shows one idle TC, switch to pltpu.CORE_PARALLEL here.
            dimension_semantics=("parallel",),
            vmem_limit_bytes=32 * 1024 * 1024,
        ),
    )(coef, cos_tab, sin_tab)

    # Unfold lane-packed positions back to (seq, d_model); trim k-fold padding.
    pe = folded.reshape(rows * k, d_model)[:seq_len]
    return pe[None]                          # (1, seq_len, d_model), float32


def positional_encoding(x):
    """Pallas equivalent of PositionalEncoding.forward(x).

    Args:
      x: (batch, seq, d_model) array (values unused, only shapes matter).
    Returns:
      (1, seq, d_model) float32 positional-encoding table.
    """
    _, seq_len, d_model = x.shape
    return _pe_table(int(seq_len), int(d_model))


def _reference_pe(seq_len, d_model):
    # pure-JAX reference mirroring the PyTorch buffer construction
    position = jnp.arange(seq_len, dtype=jnp.float32)[:, None]
    div_term = jnp.exp(
        jnp.arange(0, d_model, 2, dtype=jnp.float32)
        * (-math.log(10000.0) / d_model)
    )
    pe = jnp.zeros((seq_len, d_model), jnp.float32)
    pe = pe.at[:, 0::2].set(jnp.sin(position * div_term))
    pe = pe.at[:, 1::2].set(jnp.cos(position * div_term))
    return pe[None]


if __name__ == "__main__":
    key = jax.random.PRNGKey(0)

    # Small shape consistent with forward(x): (batch, seq, d_model).
    batch, seq, d_model = 2, 8, 32
    x = jax.random.normal(key, (batch, seq, d_model), dtype=jnp.float32)

    out = jax.block_until_ready(positional_encoding(x))
    ref = _reference_pe(seq, d_model)
    assert out.shape == (1, seq, d_model), out.shape
    assert jnp.allclose(out, ref, atol=1e-6, rtol=0.0), \
        float(jnp.max(jnp.abs(out - ref)))

    # Fold-remainder path: seq not divisible by the lane-fold factor (k=4).
    seq_b, d_b = 1001, 32
    out_b = jax.block_until_ready(_pe_table(seq_b, d_b))
    ref_b = _reference_pe(seq_b, d_b)
    assert out_b.shape == (1, seq_b, d_b), out_b.shape
    assert jnp.allclose(out_b, ref_b, atol=1e-6, rtol=0.0), \
        float(jnp.max(jnp.abs(out_b - ref_b)))

    # Multi-tile path (grid > 1): force small tiles so 4 tiles are used.
    # Tiles > 0 split the angle as phi + theta instead of torch's single
    # rounding of position*freq; the difference is bounded by ~1.5 ulp of the
    # angle (~4e-4 at position 4095), so 2e-3 is ample headroom while still
    # catching any real indexing/tiling bug (which would be O(1)).
    seq_c, d_c = 4096, 64
    out_c = jax.block_until_ready(_pe_table(seq_c, d_c, 512))
    ref_c = _reference_pe(seq_c, d_c)
    assert out_c.shape == (1, seq_c, d_c), out_c.shape
    assert jnp.allclose(out_c, ref_c, atol=2e-3, rtol=0.0), \
        float(jnp.max(jnp.abs(out_c - ref_c)))

    print("KERNEL_OK")
</pallas_src>

<mosaic_0001>
module attributes {stable_mosaic.version = 11 : i64} {
  func.func @_pe_kernel(%arg0: i32, %arg1: memref<1x2x128xf32, #tpu.memory_space<vmem>>, %arg2: memref<2x128xf32, #tpu.memory_space<vmem>>, %arg3: memref<2x128xf32, #tpu.memory_space<vmem>>, %arg4: memref<2x128xf32, #tpu.memory_space<vmem>>) attributes {dimension_semantics = [#tpu.dimension_semantics<parallel>], iteration_bounds = array<i64: 1>, scalar_prefetch = 0 : i64, scratch_operands = 0 : i64, tpu.core_type = #tpu.core_type<tc>, window_params = [{transform_indices = @transform_0, window_bounds = array<i64: 1, 2, 128>}, {pipeline_mode = #tpu.pipeline_mode<synchronous>, transform_indices = @transform_1, window_bounds = array<i64: 2, 128>}, {pipeline_mode = #tpu.pipeline_mode<synchronous>, transform_indices = @transform_2, window_bounds = array<i64: 2, 128>}, {transform_indices = @transform_3, window_bounds = array<i64: 2, 128>}]} {
    %c0 = arith.constant 0 : index
    %c0_0 = arith.constant 0 : index
    %c0_1 = arith.constant 0 : index
    %0 = vector.load %arg1[%c0, %c0_0, %c0_1] : memref<1x2x128xf32, #tpu.memory_space<vmem>>, vector<1x1x128xf32>
    %1 = vector.shape_cast %0 : vector<1x1x128xf32> to vector<1x128xf32>
    %c0_2 = arith.constant 0 : index
    %c1 = arith.constant 1 : index
    %c0_3 = arith.constant 0 : index
    %2 = vector.load %arg1[%c0_2, %c1, %c0_3] : memref<1x2x128xf32, #tpu.memory_space<vmem>>, vector<1x1x128xf32>
    %3 = vector.shape_cast %2 : vector<1x1x128xf32> to vector<1x128xf32>
    %c0_4 = arith.constant 0 : index
    %c0_5 = arith.constant 0 : index
    %4 = vector.load %arg2[%c0_4, %c0_5] : memref<2x128xf32, #tpu.memory_space<vmem>>, vector<2x128xf32>
    %5 = vector.broadcast %1 : vector<1x128xf32> to vector<2x128xf32>
    %6 = arith.mulf %5, %4 : vector<2x128xf32>
    %c0_6 = arith.constant 0 : index
    %c0_7 = arith.constant 0 : index
    %7 = vector.load %arg3[%c0_6, %c0_7] : memref<2x128xf32, #tpu.memory_space<vmem>>, vector<2x128xf32>
    %8 = vector.broadcast %3 : vector<1x128xf32> to vector<2x128xf32>
    %9 = arith.mulf %8, %7 : vector<2x128xf32>
    %10 = arith.addf %6, %9 : vector<2x128xf32>
    %c0_8 = arith.constant 0 : index
    %c0_9 = arith.constant 0 : index
    %11 = vector.load %arg4[%c0_8, %c0_9] : memref<2x128xf32, #tpu.memory_space<vmem>>, vector<2x128xf32>
    tpu.vector_store %arg4[%c0_8, %c0_9], %10 {strides = array<i32>} : memref<2x128xf32, #tpu.memory_space<vmem>>, vector<2x128xf32>,
    return
  }
  func.func @transform_0(%arg0: i32) -> (i32, i32, i32) {
    %c0_i32 = arith.constant 0 : i32
    %c0_i32_0 = arith.constant 0 : i32
    %c0_i32_1 = arith.constant 0 : i32
    return %arg0, %c0_i32, %c0_i32_0 : i32, i32, i32
  }
  func.func @transform_1(%arg0: i32) -> (i32, i32) {
    %c0_i32 = arith.constant 0 : i32
    %c0_i32_0 = arith.constant 0 : i32
    %c0_i32_1 = arith.constant 0 : i32
    return %c0_i32, %c0_i32_0 : i32, i32
  }
  func.func @transform_2(%arg0: i32) -> (i32, i32) {
    %c0_i32 = arith.constant 0 : i32
    %c0_i32_0 = arith.constant 0 : i32
    %c0_i32_1 = arith.constant 0 : i32
    return %c0_i32, %c0_i32_0 : i32, i32
  }
  func.func @transform_3(%arg0: i32) -> (i32, i32) {
    %c0_i32 = arith.constant 0 : i32
    %c0_i32_0 = arith.constant 0 : i32
    return %arg0, %c0_i32 : i32, i32
  }
}

</mosaic_0001>

<llo_original>
// kernel: tpu_custom_call.1
$region0: #{tpu_custom_call.1}
  #allocation0 [shape = 'u32[]', space=smem, size = 0x4, offset = 0x4, fixed_abs, tag = 'smem constant byte address 0x4 - core index']
  #allocation1 [shape = 'u32[144,128]{1,0:T(1,128)}', space=vmem, size = 0x12000, scoped, tag = 'internal scratch']
  %s0 = inlined_call_operand.hbm [shape: f32[1,2,128], index: 0, kind: input, shape index: {}]
  %s1 = inlined_call_operand.vmem [shape: f32[2,128], index: 1, kind: input, shape index: {}]
  %s2 = inlined_call_operand.vmem [shape: f32[2,128], index: 2, kind: input, shape index: {}]
  %s3 = inlined_call_operand.hbm [shape: f32[2,128], index: 3, kind: output, shape index: {}]
  %s4 = sld [smem:[#allocation0]]
  $region26: #{tpu_custom_call.1} parent=0
    _
  %s6 = ssub.s32 1, %s4
  %s7 = scalar_select 0, %s6, %s4
  $region1: #{tpu_custom_call.1} parent=0
    #allocation2 [shape = 'u8[1024]{0}', space=vmem, size = 0x400, scoped, tag = 'input window, operand 0, single buffered']
    #allocation3 [shape = 's32[1]{0}', space=sflag, size = 0x4, scoped, tag = 'scoped memory for tpu_custom_call.1']
    #allocation4 [shape = 's32[1]{0}', space=sflag, size = 0x4, scoped, tag = 'scoped memory for tpu_custom_call.1']
    #allocation5 [shape = 'u8[1024]{0}', space=vmem, size = 0x400, scoped, tag = 'output window, operand 0, single buffered']
    %8 = vsyncpa [#allocation3], 0
    %9 = vsyncpa [#allocation4], 0
    // Predicated region
    $region2: #{tpu_custom_call.1} parent=1 // pred_check
      _
    $region3: #{tpu_custom_call.1} parent=1 // pred_check_branch
      %11 = sbr.rel (0) target = $region5
    $region4: #{tpu_custom_call.1} parent=1 // pred_region
      %s13 = ssub.s32 32, 32
      %14 = vsyncadd [#allocation3], %s13
      %s16 = sshll.u32 [#allocation2], 4
      %s17 = int_to_ptr.vmem [resolvable:$true] %s16
      %19 = dma.hbm_to_vmem [thread:$0]  %s0, 32, %s17, [#allocation3]
    $region5: #{tpu_custom_call.1} parent=1 // pred_fallthru
      _
    // Predicated region
    $region6: #{tpu_custom_call.1} parent=1 // pred_check
      _
    $region7: #{tpu_custom_call.1} parent=1 // pred_check_branch
      %21 = sbr.rel (0) target = $region9
    $region8: #{tpu_custom_call.1} parent=1 // pred_region
      _
    $region9: #{tpu_custom_call.1} parent=1 // pred_fallthru
      _
    // Predicated region
    $region10: #{tpu_custom_call.1} parent=1 // pred_check
      _
    $region11: #{tpu_custom_call.1} parent=1 // pred_check_branch
      %23 = sbr.rel (0) target = $region13
    $region12: #{tpu_custom_call.1} parent=1 // pred_region
      _
    $region13: #{tpu_custom_call.1} parent=1 // pred_fallthru
      _
    // Predicated region
    $region14: #{tpu_custom_call.1} parent=1 // pred_check
      _
    $region15: #{tpu_custom_call.1} parent=1 // pred_check_branch
      %25 = sbr.rel (0) target = $region17
    $region16: #{tpu_custom_call.1} parent=1 // pred_region
      %26 = dma.done [#allocation3], 32
    $region17: #{tpu_custom_call.1} parent=1 // pred_fallthru
      _
    %v27 = vld [vmem:[#allocation2] sm:$0x1]
    %v28 = vld [vmem:[#allocation2 + $0x1] sm:$0x1]
    %v29 = vld [vmem:[%s1] sm:$0x3]
    %v30 = vlaneseq
    %v31 = vshrl.u32 %v30, 7
    %v32 = vsub.s32 0, %v31
    %v33 = vrot.slane %v27, %v32
    %v34 = vmul.f32 %v33, %v29
    %v35 = vld [vmem:[%s2] sm:$0x3]
    %v36 = vlaneseq
    %v37 = vshrl.u32 %v36, 7
    %v38 = vsub.s32 0, %v37
    %v39 = vrot.slane %v28, %v38
    %v40 = vmul.f32 %v39, %v35
    %v41 = vadd.f32 %v34, %v40
    %42 = vst [vmem:[#allocation5] sm:$0x3] %v41
    // Predicated region
    $region18: #{tpu_custom_call.1} parent=1 // pred_check
      _
    $region19: #{tpu_custom_call.1} parent=1 // pred_check_branch
      %44 = sbr.rel (0) target = $region21
    $region20: #{tpu_custom_call.1} parent=1 // pred_region
      %s46 = ssub.s32 32, 32
      %47 = vsyncadd [#allocation4], %s46
      %s49 = sshll.u32 [#allocation5], 4
      %s50 = int_to_ptr.vmem [resolvable:$true] %s49
      %52 = dma.vmem_to_hbm [thread:$0]  %s50, 32, %s3, [#allocation4]
    $region21: #{tpu_custom_call.1} parent=1 // pred_fallthru
      _
    // Predicated region
    $region22: #{tpu_custom_call.1} parent=1 // pred_check
      _
    $region23: #{tpu_custom_call.1} parent=1 // pred_check_branch
      %54 = sbr.rel (0) target = $region25
    $region24: #{tpu_custom_call.1} parent=1 // pred_region
      %55 = dma.done [#allocation4], 32
    $region25: #{tpu_custom_call.1} parent=1 // pred_fallthru
      _
    %56 = vsyncpa [#allocation3], 1
    %57 = vsyncpa [#allocation4], 1

</llo_original>
